<compile_context>
chip_gen: v7x
topology: tpu7x:2x2x1
jax: 0.10.0
libtpu: 0.0.40
codegen_flags: <defaults>
</compile_context>

<pallas_src>
import functools

import jax
import jax.numpy as jnp
from jax.experimental import pallas as pl
from jax.experimental.pallas import tpu as pltpu


def _gnu_kernel(adj_ref, x1_ref, x_ref, lw_ref, o_ref, acc_ref, *, tk, x1_resident):
    k = pl.program_id(1)

    @pl.when(k == 0)
    def _():
        acc_ref[...] = jnp.zeros_like(acc_ref)

    if x1_resident:
        # Whole x1 lives in VMEM; take the k-th (tk, out_feat) slab (start is tk-aligned).
        start = pl.multiple_of(k * tk, tk)
        x1_blk = x1_ref[pl.ds(start, tk), :]
    else:
        x1_blk = x1_ref[...]

    # Dominant matmul: (TM, TK) @ (TK, out_feat), bf16 inputs, f32 accumulate on MXU.
    acc_ref[...] += jnp.dot(adj_ref[...], x1_blk, preferred_element_type=jnp.float32)

    @pl.when(k == pl.num_programs(1) - 1)
    def _():
        # Self-loop term (tiny matmul) + bias + LayerNorm(eps=1e-5, elementwise_affine=False).
        x2 = jnp.dot(x_ref[...].astype(jnp.float32), lw_ref[...],
                     preferred_element_type=jnp.float32)
        z = acc_ref[...] + x2 + 1e-6
        mean = jnp.mean(z, axis=-1, keepdims=True)
        centered = z - mean
        var = jnp.mean(centered * centered, axis=-1, keepdims=True)
        o_ref[...] = (centered * jax.lax.rsqrt(var + 1e-5)).astype(o_ref.dtype)


def _round_up(v, m):
    return (v + m - 1) // m * m


@functools.partial(
    jax.jit,
    static_argnames=("num_base", "tm", "tk", "adj_matmul_dtype", "x1_resident_bytes"))
def graph_node_update_pallas(adj, x, weight, loop_weight, num_base, *,
                             tm=512, tk=512, adj_matmul_dtype=jnp.bfloat16,
                             x1_resident_bytes=2 * 1024 * 1024):
    """adj: (N, N), x: (N, in_feat), weight: (1, num_base*si*so),
    loop_weight: (in_feat, out_feat)."""
    n, in_feat = x.shape
    out_feat = loop_weight.shape[1]
    if in_feat % num_base != 0 or out_feat % num_base != 0:
        raise ValueError("Feature size must be a multiple of num_base (%d)." % num_base)
    si, so = in_feat // num_base, out_feat // num_base

    # --- tiny glue, done once: per-base einsum == x @ block_diag(W_0..W_{B-1}) ---
    w3 = weight.reshape(num_base, si, so)
    x1 = jnp.einsum("abc,bcd->abd", x.reshape(n, num_base, si), w3,
                    precision=jax.lax.Precision.HIGHEST).reshape(n, out_feat)

    # --- tile sizes: row tiles multiple of 8 (sublane), reduction tiles multiple of 128 (lane) ---
    tm = _round_up(min(tm, n), 8)
    tk = _round_up(min(tk, n), 128)
    n_rows = _round_up(n, tm)
    n_cols = _round_up(n, tk)

    # Zero-pad so the grid divides evenly; padded rows LayerNorm to 0 and are sliced off.
    # Aligned inputs skip the padding copy.
    adj_c = adj.astype(adj_matmul_dtype)
    if (n_rows, n_cols) != (n, n):
        adj_p = jnp.zeros((n_rows, n_cols), adj_matmul_dtype).at[:n, :n].set(adj_c)
    else:
        adj_p = adj_c
    x1_c = x1.astype(adj_matmul_dtype)
    if n_cols != n:
        x1_p = jnp.zeros((n_cols, out_feat), adj_matmul_dtype).at[:n].set(x1_c)
    else:
        x1_p = x1_c
    if n_rows != n:
        x_p = jnp.zeros((n_rows, in_feat), x.dtype).at[:n].set(x)
    else:
        x_p = x
    lw = loop_weight.astype(jnp.float32)

    grid = (n_rows // tm, n_cols // tk)

    # x1 fully resident in VMEM when small (avoids re-streaming it per row tile).
    x1_bytes = n_cols * out_feat * jnp.dtype(adj_matmul_dtype).itemsize
    x1_resident = bool(x1_bytes <= x1_resident_bytes)
    if x1_resident:
        x1_spec = pl.BlockSpec((n_cols, out_feat), lambda i, k: (0, 0))
        x1_hbm_reads = x1_bytes
    else:
        x1_spec = pl.BlockSpec((tk, out_feat), lambda i, k: (k, 0))
        x1_hbm_reads = grid[0] * x1_bytes

    flops = 2 * n_rows * n_cols * out_feat + 2 * n_rows * in_feat * out_feat
    bytes_accessed = (adj_p.size * adj_p.dtype.itemsize
                      + x1_hbm_reads
                      + x_p.size * x_p.dtype.itemsize
                      + lw.size * 4
                      + n_rows * out_feat * jnp.dtype(x.dtype).itemsize)

    kernel = functools.partial(_gnu_kernel, tk=tk, x1_resident=x1_resident)

    out = pl.pallas_call(
        kernel,
        out_shape=jax.ShapeDtypeStruct((n_rows, out_feat), x.dtype),
        grid_spec=pltpu.PrefetchScalarGridSpec(
            num_scalar_prefetch=0,
            grid=grid,
            in_specs=[
                # adj is the only large operand; it advances along both grid axes.
                pl.BlockSpec((tm, tk), lambda i, k: (i, k)),
                # x1: fully resident, or streamed along k (see above).
                x1_spec,
                # x tile and loop_weight stay resident across the whole k sweep.
                pl.BlockSpec((tm, in_feat), lambda i, k: (i, 0)),
                pl.BlockSpec((in_feat, out_feat), lambda i, k: (0, 0)),
            ],
            out_specs=pl.BlockSpec((tm, out_feat), lambda i, k: (i, 0)),
            scratch_shapes=[pltpu.VMEM((tm, out_feat), jnp.float32)],
        ),
        compiler_params=pltpu.CompilerParams(
            dimension_semantics=("parallel", "arbitrary"),
            vmem_limit_bytes=32 * 1024 * 1024,
        ),
        cost_estimate=pl.CostEstimate(
            flops=flops, transcendentals=n_rows, bytes_accessed=bytes_accessed),
    )(adj_p, x1_p, x_p, lw)

    return out[:n]


def _xavier_uniform(key, shape, gain):
    fan_in, fan_out = shape[0], shape[1]
    bound = gain * jnp.sqrt(6.0 / (fan_in + fan_out))
    return jax.random.uniform(key, shape, jnp.float32, -bound, bound)


def _reference(adj, x, weight, loop_weight, num_base):
    n, in_feat = x.shape
    out_feat = loop_weight.shape[1]
    si, so = in_feat // num_base, out_feat // num_base
    w3 = weight.reshape(num_base, si, so)
    h3 = x.reshape(-1, num_base, si)
    x1 = jnp.einsum('abc,bcd->abd', h3, w3, precision='highest').reshape(-1, out_feat)
    x1 = jnp.dot(adj, x1, precision='highest')
    x2 = jnp.dot(x, loop_weight, precision='highest')
    z = x1 + x2 + 1e-6
    mean = jnp.mean(z, axis=-1, keepdims=True)
    var = jnp.mean((z - mean) ** 2, axis=-1, keepdims=True)
    return (z - mean) / jnp.sqrt(var + 1e-5)


def _make_inputs(key, n, in_feat, out_feat, num_base):
    si, so = in_feat // num_base, out_feat // num_base
    k_adj, k_x, k_w, k_lw = jax.random.split(key, 4)
    # Binary adjacency (typical GNN input): exactly representable in bf16.
    adj = jax.random.bernoulli(k_adj, 0.3, (n, n)).astype(jnp.float32)
    x = jax.random.normal(k_x, (n, in_feat), jnp.float32)
    gain = jnp.sqrt(2.0)  # calculate_gain('relu')
    weight = _xavier_uniform(k_w, (1, num_base * si * so), gain)        # (1, B*si*so)
    loop_weight = _xavier_uniform(k_lw, (in_feat, out_feat), gain)      # (in_feat, out_feat)
    return adj, x, weight, loop_weight


if __name__ == "__main__":
    # Small, module-consistent shapes: N nodes, in_feat = out_feat = 32, num_base = 4.
    IN_FEAT, OUT_FEAT, NUM_BASE = 32, 32, 4
    key = jax.random.PRNGKey(0)

    # --- Test 1: aligned N, resident-x1 path, grid (2, 2) exercises the parallel row
    #     axis and the k-accumulation / pl.when finalize path. ---
    N = 256
    adj, x, weight, loop_weight = _make_inputs(key, N, IN_FEAT, OUT_FEAT, NUM_BASE)
    out = graph_node_update_pallas(adj, x, weight, loop_weight, NUM_BASE, tm=128, tk=128)
    out = jax.block_until_ready(out)
    ref = _reference(adj, x, weight, loop_weight, NUM_BASE)
    assert out.shape == (N, OUT_FEAT)
    # bf16 adj/x1 on the MXU (f32 accumulate) vs an f32 'highest'-precision reference:
    # tolerance covers bf16 rounding of x1 (adj is 0/1, hence exact in bf16).
    assert jnp.allclose(out, ref, atol=3e-2, rtol=3e-2), "mismatch vs reference (resident)"

    # --- Test 2: same shapes, forced streaming-x1 path (large-graph fallback). ---
    out_s = graph_node_update_pallas(adj, x, weight, loop_weight, NUM_BASE,
                                     tm=128, tk=128, x1_resident_bytes=0)
    out_s = jax.block_until_ready(out_s)
    assert jnp.allclose(out_s, ref, atol=3e-2, rtol=3e-2), "mismatch vs reference (streamed)"

    # --- Test 3: ragged N (not 128-aligned) exercises zero-padding + slice-off. ---
    N2 = 200
    adj2, x2, weight2, loop_weight2 = _make_inputs(jax.random.PRNGKey(1), N2,
                                                   IN_FEAT, OUT_FEAT, NUM_BASE)
    out2 = graph_node_update_pallas(adj2, x2, weight2, loop_weight2, NUM_BASE,
                                    tm=128, tk=128)
    out2 = jax.block_until_ready(out2)
    ref2 = _reference(adj2, x2, weight2, loop_weight2, NUM_BASE)
    assert out2.shape == (N2, OUT_FEAT)
    assert jnp.allclose(out2, ref2, atol=3e-2, rtol=3e-2), "mismatch vs reference (ragged)"

    print("KERNEL_OK")
</pallas_src>

<mosaic_0001>
module attributes {stable_mosaic.version = 11 : i64} {
  func.func @_gnu_kernel(%arg0: i32, %arg1: i32, %arg2: memref<128x128xbf16, #tpu.memory_space<vmem>>, %arg3: memref<256x32xbf16, #tpu.memory_space<vmem>>, %arg4: memref<128x32xf32, #tpu.memory_space<vmem>>, %arg5: memref<32x32xf32, #tpu.memory_space<vmem>>, %arg6: memref<128x32xf32, #tpu.memory_space<vmem>>, %arg7: memref<128x32xf32, #tpu.memory_space<vmem>>) attributes {dimension_semantics = [#tpu.dimension_semantics<parallel>, #tpu.dimension_semantics<arbitrary>], iteration_bounds = array<i64: 2, 2>, scalar_prefetch = 0 : i64, scratch_operands = 1 : i64, tpu.core_type = #tpu.core_type<tc>, window_params = [{transform_indices = @transform_0, window_bounds = array<i64: 128, 128>}, {pipeline_mode = #tpu.pipeline_mode<synchronous>, transform_indices = @transform_1, window_bounds = array<i64: 256, 32>}, {transform_indices = @transform_2, window_bounds = array<i64: 128, 32>}, {pipeline_mode = #tpu.pipeline_mode<synchronous>, transform_indices = @transform_3, window_bounds = array<i64: 32, 32>}, {transform_indices = @transform_4, window_bounds = array<i64: 128, 32>}]} {
    %c0_i32 = arith.constant 0 : i32
    %0 = arith.cmpi eq, %arg1, %c0_i32 : i32
    %1 = arith.extui %0 : i1 to i32
    %c0_i32_0 = arith.constant 0 : i32
    %2 = arith.cmpi ne, %1, %c0_i32_0 : i32
    scf.if %2 {
      %cst_8 = arith.constant 0.000000e+00 : f32
      %15 = vector.broadcast %cst_8 : f32 to vector<128x32xf32>
      %c0_9 = arith.constant 0 : index
      %c0_10 = arith.constant 0 : index
      %16 = vector.load %arg7[%c0_9, %c0_10] : memref<128x32xf32, #tpu.memory_space<vmem>>, vector<128x32xf32>
      tpu.vector_store %arg7[%c0_9, %c0_10], %15 {strides = array<i32>} : memref<128x32xf32, #tpu.memory_space<vmem>>, vector<128x32xf32>,
    } else {
    }
    %c128_i32 = arith.constant 128 : i32
    %3 = arith.muli %arg1, %c128_i32 : i32
    %4 = tpu.assume_multiple %3, 128 : i32
    %5 = arith.index_cast %4 : i32 to index
    %c0 = arith.constant 0 : index
    %6 = vector.load %arg3[%5, %c0] : memref<256x32xbf16, #tpu.memory_space<vmem>>, vector<128x32xbf16>
    %c0_1 = arith.constant 0 : index
    %c0_2 = arith.constant 0 : index
    %7 = vector.load %arg7[%c0_1, %c0_2] : memref<128x32xf32, #tpu.memory_space<vmem>>, vector<128x32xf32>
    %c0_3 = arith.constant 0 : index
    %c0_4 = arith.constant 0 : index
    %8 = vector.load %arg2[%c0_3, %c0_4] : memref<128x128xbf16, #tpu.memory_space<vmem>>, vector<128x128xbf16>
    %cst = arith.constant dense<0.000000e+00> : vector<128x32xf32>
    %9 = tpu.matmul %8, %6, %cst {dimension_numbers = #tpu.dot_dimension_numbers<[1], [0], [0], [1], [0, 0, 1, 1], [], []>} : vector<128x128xbf16>, vector<128x32xbf16>, vector<128x32xf32> -> vector<128x32xf32>
    %10 = arith.addf %7, %9 : vector<128x32xf32>
    %c0_5 = arith.constant 0 : index
    %c0_6 = arith.constant 0 : index
    %11 = vector.load %arg7[%c0_5, %c0_6] : memref<128x32xf32, #tpu.memory_space<vmem>>, vector<128x32xf32>
    tpu.vector_store %arg7[%c0_5, %c0_6], %10 {strides = array<i32>} : memref<128x32xf32, #tpu.memory_space<vmem>>, vector<128x32xf32>,
    %c1_i32 = arith.constant 1 : i32
    %12 = arith.cmpi eq, %arg1, %c1_i32 : i32
    %13 = arith.extui %12 : i1 to i32
    %c0_i32_7 = arith.constant 0 : i32
    %14 = arith.cmpi ne, %13, %c0_i32_7 : i32
    scf.if %14 {
      %c0_8 = arith.constant 0 : index
      %c0_9 = arith.constant 0 : index
      %15 = vector.load %arg4[%c0_8, %c0_9] : memref<128x32xf32, #tpu.memory_space<vmem>>, vector<128x32xf32>
      %c0_10 = arith.constant 0 : index
      %c0_11 = arith.constant 0 : index
      %16 = vector.load %arg5[%c0_10, %c0_11] : memref<32x32xf32, #tpu.memory_space<vmem>>, vector<32x32xf32>
      %cst_12 = arith.constant dense<0.000000e+00> : vector<128x32xf32>
      %17 = tpu.matmul %15, %16, %cst_12 {dimension_numbers = #tpu.dot_dimension_numbers<[1], [0], [0], [1], [0, 0, 1, 1], [], []>} : vector<128x32xf32>, vector<32x32xf32>, vector<128x32xf32> -> vector<128x32xf32>
      %c0_13 = arith.constant 0 : index
      %c0_14 = arith.constant 0 : index
      %18 = vector.load %arg7[%c0_13, %c0_14] : memref<128x32xf32, #tpu.memory_space<vmem>>, vector<128x32xf32>
      %19 = arith.addf %18, %17 : vector<128x32xf32>
      %cst_15 = arith.constant 9.99999997E-7 : f32
      %20 = vector.broadcast %cst_15 : f32 to vector<128x32xf32>
      %21 = arith.addf %19, %20 : vector<128x32xf32>
      %cst_16 = arith.constant dense<0.000000e+00> : vector<128xf32>
      %22 = vector.multi_reduction <add>, %21, %cst_16 [1] : vector<128x32xf32> to vector<128xf32>
      %23 = vector.shape_cast %22 : vector<128xf32> to vector<128x1xf32>
      %cst_17 = arith.constant 3.200000e+01 : f32
      %24 = vector.broadcast %cst_17 : f32 to vector<128x1xf32>
      %25 = arith.divf %23, %24 : vector<128x1xf32>
      %26 = vector.broadcast %25 : vector<128x1xf32> to vector<128x32xf32>
      %27 = arith.subf %21, %26 : vector<128x32xf32>
      %28 = arith.mulf %27, %27 : vector<128x32xf32>
      %cst_18 = arith.constant dense<0.000000e+00> : vector<128xf32>
      %29 = vector.multi_reduction <add>, %28, %cst_18 [1] : vector<128x32xf32> to vector<128xf32>
      %30 = vector.shape_cast %29 : vector<128xf32> to vector<128x1xf32>
      %cst_19 = arith.constant 3.200000e+01 : f32
      %31 = vector.broadcast %cst_19 : f32 to vector<128x1xf32>
      %32 = arith.divf %30, %31 : vector<128x1xf32>
      %cst_20 = arith.constant 9.99999974E-6 : f32
      %33 = vector.broadcast %cst_20 : f32 to vector<128x1xf32>
      %34 = arith.addf %32, %33 : vector<128x1xf32>
      %35 = math.rsqrt %34 : vector<128x1xf32>
      %36 = vector.broadcast %35 : vector<128x1xf32> to vector<128x32xf32>
      %37 = arith.mulf %27, %36 : vector<128x32xf32>
      %c0_21 = arith.constant 0 : index
      %c0_22 = arith.constant 0 : index
      %38 = vector.load %arg6[%c0_21, %c0_22] : memref<128x32xf32, #tpu.memory_space<vmem>>, vector<128x32xf32>
      tpu.vector_store %arg6[%c0_21, %c0_22], %37 {strides = array<i32>} : memref<128x32xf32, #tpu.memory_space<vmem>>, vector<128x32xf32>,
    } else {
    }
    return
  }
  func.func @transform_0(%arg0: i32, %arg1: i32) -> (i32, i32) {
    %c0_i32 = arith.constant 0 : i32
    return %arg0, %arg1 : i32, i32
  }
  func.func @transform_1(%arg0: i32, %arg1: i32) -> (i32, i32) {
    %c0_i32 = arith.constant 0 : i32
    %c0_i32_0 = arith.constant 0 : i32
    %c0_i32_1 = arith.constant 0 : i32
    return %c0_i32, %c0_i32_0 : i32, i32
  }
  func.func @transform_2(%arg0: i32, %arg1: i32) -> (i32, i32) {
    %c0_i32 = arith.constant 0 : i32
    %c0_i32_0 = arith.constant 0 : i32
    return %arg0, %c0_i32 : i32, i32
  }
  func.func @transform_3(%arg0: i32, %arg1: i32) -> (i32, i32) {
    %c0_i32 = arith.constant 0 : i32
    %c0_i32_0 = arith.constant 0 : i32
    %c0_i32_1 = arith.constant 0 : i32
    return %c0_i32, %c0_i32_0 : i32, i32
  }
  func.func @transform_4(%arg0: i32, %arg1: i32) -> (i32, i32) {
    %c0_i32 = arith.constant 0 : i32
    %c0_i32_0 = arith.constant 0 : i32
    return %arg0, %c0_i32 : i32, i32
  }
}

</mosaic_0001>

<llo_original>
// kernel: graph_node_update_pallas.1
$region0: #{graph_node_update_pallas.1}
  #allocation0 [shape = 'u32[]', space=smem, size = 0x4, offset = 0x4, fixed_abs, tag = 'smem constant byte address 0x4 - core index']
  #allocation1 [shape = 'u32[144,128]{1,0:T(1,128)}', space=vmem, size = 0x12000, scoped, tag = 'internal scratch']
  #allocation2 [shape = 'f32[128,32]{1,0:T(8,128)}', space=vmem, size = 0x10000, scoped, tag = 'scratch operand']
  %s0 = inlined_call_operand.vmem [shape: bf16[256,256], index: 0, kind: input, shape index: {}]
  %s1 = inlined_call_operand.vmem [shape: bf16[256,32], index: 1, kind: input, shape index: {}]
  %s2 = inlined_call_operand.vmem [shape: f32[256,32], index: 2, kind: input, shape index: {}]
  %s3 = inlined_call_operand.vmem [shape: f32[32,32], index: 3, kind: input, shape index: {}]
  %s4 = inlined_call_operand.vmem [shape: f32[256,32], index: 4, kind: output, shape index: {}]
  %s5 = sld [smem:[#allocation0]]
  $region98: #{graph_node_update_pallas.1} parent=0
    _
  %s7 = ssub.s32 1, %s5
  %s8 = scalar_select 0, %s7, %s5
  $region1: #{graph_node_update_pallas.1} parent=0
    #allocation3 [shape = 'u8[65536]{0}', space=vmem, size = 0x10000, scoped, tag = 'input window, operand 0']
    loop: start=0, step=1, limit=6
    $region2: #{graph_node_update_pallas.1} parent=1 // loop_pre_header
      _
    $region3: #{graph_node_update_pallas.1} parent=1 // loop_header
      %s10 = sphi 0, %s14
      %p11 = scmp.ge.s32.totalorder %s10, 6
      %s17 = sphi 0, %s29
      %s18 = sphi 0, %s25
      %s19 = sphi 0, %s17
      %s20 = sphi 0, %s18
      %s21 = sphi 0, %s19
      %s22 = sphi 0, %s20
      %s34 = sphi 0, %s36
      %s37 = sphi 0, %s34
      %s38 = sphi 0, %s37
      %s54 = sphi 0, %s38
      %s58 = sphi 0, %s58
      %s60 = sphi 0, %s58
      %s61 = sphi 0, %s60
      %s75 = sphi 0, %s61
      %s81 = sphi 0, %s83
      %s84 = sphi 0, %s81
      %s85 = sphi 0, %s84
      %s101 = sphi 0, %s85
      %s105 = sphi 0, %s105
      %s107 = sphi 0, %s105
      %s108 = sphi 0, %s107
      %s122 = sphi 0, %s108
      %s128 = sphi 0, %s130
      %s131 = sphi 0, %s128
      %s132 = sphi 0, %s131
      %s148 = sphi 0, %s132
    $region4: #{graph_node_update_pallas.1} parent=1 // loop_header_branch
      %13 = sbr.rel (%p11) target = $region8
    $region5: #{graph_node_update_pallas.1} parent=1 // loop_body
      %s15 = ssub.s32 %s10, 1
      %s16 = ssub.s32 %s10, 2
      %s23 = sadd.s32 1, %s18
      %p24 = scmp.ge.s32.totalorder %s23, 2
      %s25 = scalar_select %p24, 0, %s23
      %s26 = sadd.s32 1, %s17
      %s27 = scalar_select %p24, %s26, %s17
      %p28 = scmp.ge.s32.totalorder %s27, 2
      %s29 = scalar_select %p28, 0, %s27
      %s30 = ssub.s32 %s17, %s29
      %s31 = ssub.s32 %s18, %s25
      %s32 = sor.u32 %s30, %s31
      %p33 = scmp.eq.s32.totalorder %s32, 0
      %s35 = sadd.s32 %s34, 1
      %s36 = scalar_select %p33, %s34, %s35
      %p39 = pneg %p33
      %p40 = scmp.eq.s32.totalorder %s10, 3
      %p41 = por %p39, %p40
      %p42 = scmp.ne.s32.totalorder %s34, %s37
      %p43 = scmp.eq.s32.totalorder %s10, 0
      %p44 = por %p42, %p43
      %p45 = scmp.ne.s32.totalorder %s34, %s37
      %p46 = scmp.eq.s32.totalorder %s15, 3
      %p47 = por %p45, %p46
      %p48 = scmp.ne.s32.totalorder %s37, %s38
      %p49 = scmp.eq.s32.totalorder %s15, 0
      %p50 = por %p48, %p49
      %p51 = scmp.ne.s32.totalorder %s37, %s38
      %p52 = scmp.eq.s32.totalorder %s16, 3
      %p53 = por %p51, %p52
      %p55 = scmp.ne.s32.totalorder %s38, %s54
      %p56 = scmp.eq.s32.totalorder %s16, 0
      %p57 = por %p55, %p56
      %s59 = sadd.s32 %s58, 1
      %p62 = scmp.eq.s32.totalorder %s10, 3
      %p63 = scmp.ne.s32.totalorder %s58, %s60
      %p64 = scmp.eq.s32.totalorder %s10, 0
      %p65 = por %p63, %p64
      %p66 = scmp.ne.s32.totalorder %s58, %s60
      %p67 = scmp.eq.s32.totalorder %s15, 3
      %p68 = por %p66, %p67
      %p69 = scmp.ne.s32.totalorder %s60, %s61
      %p70 = scmp.eq.s32.totalorder %s15, 0
      %p71 = por %p69, %p70
      %p72 = scmp.ne.s32.totalorder %s60, %s61
      %p73 = scmp.eq.s32.totalorder %s16, 3
      %p74 = por %p72, %p73
      %p76 = scmp.ne.s32.totalorder %s61, %s75
      %p77 = scmp.eq.s32.totalorder %s16, 0
      %p78 = por %p76, %p77
      %s79 = ssub.s32 %s17, %s29
      %p80 = scmp.eq.s32.totalorder %s79, 0
      %s82 = sadd.s32 %s81, 1
      %s83 = scalar_select %p80, %s81, %s82
      %p86 = pneg %p80
      %p87 = scmp.eq.s32.totalorder %s10, 3
      %p88 = por %p86, %p87
      %p89 = scmp.ne.s32.totalorder %s81, %s84
      %p90 = scmp.eq.s32.totalorder %s10, 0
      %p91 = por %p89, %p90
      %p92 = scmp.ne.s32.totalorder %s81, %s84
      %p93 = scmp.eq.s32.totalorder %s15, 3
      %p94 = por %p92, %p93
      %p95 = scmp.ne.s32.totalorder %s84, %s85
      %p96 = scmp.eq.s32.totalorder %s15, 0
      %p97 = por %p95, %p96
      %p98 = scmp.ne.s32.totalorder %s84, %s85
      %p99 = scmp.eq.s32.totalorder %s16, 3
      %p100 = por %p98, %p99
      %p102 = scmp.ne.s32.totalorder %s85, %s101
      %p103 = scmp.eq.s32.totalorder %s16, 0
      %p104 = por %p102, %p103
      %s106 = sadd.s32 %s105, 1
      %p109 = scmp.eq.s32.totalorder %s10, 3
      %p110 = scmp.ne.s32.totalorder %s105, %s107
      %p111 = scmp.eq.s32.totalorder %s10, 0
      %p112 = por %p110, %p111
      %p113 = scmp.ne.s32.totalorder %s105, %s107
      %p114 = scmp.eq.s32.totalorder %s15, 3
      %p115 = por %p113, %p114
      %p116 = scmp.ne.s32.totalorder %s107, %s108
      %p117 = scmp.eq.s32.totalorder %s15, 0
      %p118 = por %p116, %p117
      %p119 = scmp.ne.s32.totalorder %s107, %s108
      %p120 = scmp.eq.s32.totalorder %s16, 3
      %p121 = por %p119, %p120
      %p123 = scmp.ne.s32.totalorder %s108, %s122
      %p124 = scmp.eq.s32.totalorder %s16, 0
      %p125 = por %p123, %p124
      %s126 = ssub.s32 %s17, %s29
      %p127 = scmp.eq.s32.totalorder %s126, 0
      %s129 = sadd.s32 %s128, 1
      %s130 = scalar_select %p127, %s128, %s129
      %p133 = pneg %p127
      %p134 = scmp.eq.s32.totalorder %s10, 3
      %p135 = por %p133, %p134
      %p136 = scmp.ne.s32.totalorder %s128, %s131
      %p137 = scmp.eq.s32.totalorder %s10, 0
      %p138 = por %p136, %p137
      %p139 = scmp.ne.s32.totalorder %s128, %s131
      %p140 = scmp.eq.s32.totalorder %s15, 3
      %p141 = por %p139, %p140
      %p142 = scmp.ne.s32.totalorder %s131, %s132
      %p143 = scmp.eq.s32.totalorder %s15, 0
      %p144 = por %p142, %p143
      %p145 = scmp.ne.s32.totalorder %s131, %s132
      %p146 = scmp.eq.s32.totalorder %s16, 3
      %p147 = por %p145, %p146
      %p149 = scmp.ne.s32.totalorder %s132, %s148
      %p150 = scmp.eq.s32.totalorder %s16, 0
      %p151 = por %p149, %p150
      %p152 = scmp.le.s32.totalorder 1, %s10
      %p153 = scmp.lt.s32.totalorder %s10, 5
      %p154 = pnand %p152, %p153
      %p155 = pneg %p154
      // Predicated region
      $region9: #{graph_node_update_pallas.1} parent=5 // pred_check
        _
      $region10: #{graph_node_update_pallas.1} parent=5 // pred_check_branch
        %157 = sbr.rel (%p154) target = $region12
      $region11: #{graph_node_update_pallas.1} parent=5 // pred_region
        %s158 = ssub.s32 %s10, 1
        // Predicated region
        $region13: #{graph_node_update_pallas.1} parent=11 // pred_check
          %p159 = pneg %p71
        $region14: #{graph_node_update_pallas.1} parent=11 // pred_check_branch
          %161 = sbr.rel (%p159) target = $region16
        $region15: #{graph_node_update_pallas.1} parent=11 // pred_region
          _
        $region16: #{graph_node_update_pallas.1} parent=11 // pred_fallthru
          _
        // Predicated region
        $region17: #{graph_node_update_pallas.1} parent=11 // pred_check
          %p162 = pneg %p118
        $region18: #{graph_node_update_pallas.1} parent=11 // pred_check_branch
          %164 = sbr.rel (%p162) target = $region20
        $region19: #{graph_node_update_pallas.1} parent=11 // pred_region
          _
        $region20: #{graph_node_update_pallas.1} parent=11 // pred_fallthru
          _
      $region12: #{graph_node_update_pallas.1} parent=5 // pred_fallthru
        _
      %p165 = scmp.lt.s32.totalorder %s10, 4
      // Predicated region
      $region21: #{graph_node_update_pallas.1} parent=5 // pred_check
        %p166 = pneg %p165
      $region22: #{graph_node_update_pallas.1} parent=5 // pred_check_branch
        %168 = sbr.rel (%p166) target = $region24
      $region23: #{graph_node_update_pallas.1} parent=5 // pred_region
        // Predicated region
        $region25: #{graph_node_update_pallas.1} parent=23 // pred_check
          %p169 = pneg %p44
        $region26: #{graph_node_update_pallas.1} parent=23 // pred_check_branch
          %171 = sbr.rel (%p169) target = $region28
        $region27: #{graph_node_update_pallas.1} parent=23 // pred_region
          %s172 = sand.u32 %s34, 1
          %s173 = sand.u32 %s34, 1
          %s174 = smul.addr %s173, 64
          %s175 = scalar_lea.vmem [#allocation3], %s174
          %s176 = smul.u32 16, %s17
          %s177 = smul.addr %s176, 2
          %s178 = sadd.s32 %s18, %s177
          %s179 = smul.addr %s178, 4
          %s180 = scalar_lea.vmem %s0, %s179
          // Predicated region
          $region29: #{graph_node_update_pallas.1} parent=27 // pred_check
            _
          $region30: #{graph_node_update_pallas.1} parent=27 // pred_check_branch
            %182 = sbr.rel (0) target = $region32
          $region31: #{graph_node_update_pallas.1} parent=27 // pred_region
            // Predicated region
            $region33: #{graph_node_update_pallas.1} parent=31 // pred_check
              _
            $region34: #{graph_node_update_pallas.1} parent=31 // pred_check_branch
              %184 = sbr.rel target = $region36
            $region35: #{graph_node_update_pallas.1} parent=31 // pred_region
              // Predicated region
              $region48: #{graph_node_update_pallas.1} parent=35 // pred_check
                _
              $region49: #{graph_node_update_pallas.1} parent=35 // pred_check_branch
                %229 = sbr.rel (0) target = $region51
              $region50: #{graph_node_update_pallas.1} parent=35 // pred_region
                loop: start=0, step=1, limit=1
                $region52: #{graph_node_update_pallas.1} parent=50 // loop_pre_header
                  _
                $region53: #{graph_node_update_pallas.1} parent=50 // loop_header
                  %s231 = sphi 0, %s235
                  %p232 = scmp.ge.s32.totalorder %s231, 1
                  %s236 = sphi %s180, %s180
                  %s237 = sphi %s175, %s175
                $region54: #{graph_node_update_pallas.1} parent=50 // loop_header_branch
                  %234 = sbr.rel (%p232) target = $region58
                $region55: #{graph_node_update_pallas.1} parent=50 // loop_body
                  _
                $region56: #{graph_node_update_pallas.1} parent=50 // loop_footer
                  %s235 = sadd.s32 1, %s231
                $region57: #{graph_node_update_pallas.1} parent=50 // loop_footer_branch
                  %230 = sbr.rel target = $region53
                $region58: #{graph_node_update_pallas.1} parent=50 // loop_exit
                  _
                loop: start=0, step=1, limit=1
                $region59: #{graph_node_update_pallas.1} parent=50 // loop_pre_header
                  _
                $region60: #{graph_node_update_pallas.1} parent=50 // loop_header
                  %s240 = sphi 0, %s244
                  %p241 = scmp.ge.s32.totalorder %s240, 1
                  %s245 = sphi %s180, %s180
                  %s246 = sphi %s175, %s175
                $region61: #{graph_node_update_pallas.1} parent=50 // loop_header_branch
                  %243 = sbr.rel (%p241) target = $region65
                $region62: #{graph_node_update_pallas.1} parent=50 // loop_body
                  %v247 = vld [vmem:[%s245] sm:$0xf]
                  %248 = vst [vmem:[%s246] sm:$0xf] %v247
                  %v249 = vld [vmem:[%s245 + $0x8] sm:$0xf]
                  %250 = vst [vmem:[%s246 + $0x4] sm:$0xf] %v249
                  %v251 = vld [vmem:[%s245 + $0x10] sm:$0xf]
                  %252 = vst [vmem:[%s246 + $0x8] sm:$0xf] %v251
                  %v253 = vld [vmem:[%s245 + $0x18] sm:$0xf]
                  %254 = vst [vmem:[%s246 + $0xc] sm:$0xf] %v253
                  %v255 = vld [vmem:[%s245 + $0x20] sm:$0xf]
                  %256 = vst [vmem:[%s246 + $0x10] sm:$0xf] %v255
                  %v257 = vld [vmem:[%s245 + $0x28] sm:$0xf]
                  %258 = vst [vmem:[%s246 + $0x14] sm:$0xf] %v257
                  %v259 = vld [vmem:[%s245 + $0x30] sm:$0xf]
                  %260 = vst [vmem:[%s246 + $0x18] sm:$0xf] %v259
                  %v261 = vld [vmem:[%s245 + $0x38] sm:$0xf]
                  %262 = vst [vmem:[%s246 + $0x1c] sm:$0xf] %v261
                  %v263 = vld [vmem:[%s245 + $0x40] sm:$0xf]
                  %264 = vst [vmem:[%s246 + $0x20] sm:$0xf] %v263
                  %v265 = vld [vmem:[%s245 + $0x48] sm:$0xf]
                  %266 = vst [vmem:[%s246 + $0x24] sm:$0xf] %v265
                  %v267 = vld [vmem:[%s245 + $0x50] sm:$0xf]
                  %268 = vst [vmem:[%s246 + $0x28] sm:$0xf] %v267
                  %v269 = vld [vmem:[%s245 + $0x58] sm:$0xf]
                  %270 = vst [vmem:[%s246 + $0x2c] sm:$0xf] %v269
                  %v271 = vld [vmem:[%s245 + $0x60] sm:$0xf]
                  %272 = vst [vmem:[%s246 + $0x30] sm:$0xf] %v271
                  %v273 = vld [vmem:[%s245 + $0x68] sm:$0xf]
                  %274 = vst [vmem:[%s246 + $0x34] sm:$0xf] %v273
                  %v275 = vld [vmem:[%s245 + $0x70] sm:$0xf]
                  %276 = vst [vmem:[%s246 + $0x38] sm:$0xf] %v275
                  %v277 = vld [vmem:[%s245 + $0x78] sm:$0xf]
                  %278 = vst [vmem:[%s246 + $0x3c] sm:$0xf] %v277
                $region63: #{graph_node_update_pallas.1} parent=50 // loop_footer
                  %s244 = sadd.s32 1, %s240
                $region64: #{graph_node_update_pallas.1} parent=50 // loop_footer_branch
                  %239 = sbr.rel target = $region60
                $region65: #{graph_node_update_pallas.1} parent=50 // loop_exit
                  _
              $region51: #{graph_node_update_pallas.1} parent=35 // pred_fallthru
                _
            $region36: #{graph_node_update_pallas.1} parent=31 // pred_fallthru
              _
            // Predicated region
            $region37: #{graph_node_update_pallas.1} parent=31 // pred_check
              _
            $region38: #{graph_node_update_pallas.1} parent=31 // pred_check_branch
              %186 = sbr.rel (0) target = $region40
            $region39: #{graph_node_update_pallas.1} parent=31 // pred_region
              loop: start=0, step=1, limit=1
              $region41: #{graph_node_update_pallas.1} parent=39 // loop_pre_header
                _
              $region42: #{graph_node_update_pallas.1} parent=39 // loop_header
                %s189 = sphi 0, %s193
                %p190 = scmp.ge.s32.totalorder %s189, 1
                %s194 = sphi %s180, %s180
                %s195 = sphi %s175, %s175
              $region43: #{graph_node_update_pallas.1} parent=39 // loop_header_branch
                %192 = sbr.rel (%p190) target = $region47
              $region44: #{graph_node_update_pallas.1} parent=39 // loop_body
                %v196 = vld [vmem:[%s194] sm:$0xf]
                %197 = vst [vmem:[%s195] sm:$0xf] %v196
                %v198 = vld [vmem:[%s194 + $0x8] sm:$0xf]
                %199 = vst [vmem:[%s195 + $0x4] sm:$0xf] %v198
                %v200 = vld [vmem:[%s194 + $0x10] sm:$0xf]
                %201 = vst [vmem:[%s195 + $0x8] sm:$0xf] %v200
                %v202 = vld [vmem:[%s194 + $0x18] sm:$0xf]
                %203 = vst [vmem:[%s195 + $0xc] sm:$0xf] %v202
                %v204 = vld [vmem:[%s194 + $0x20] sm:$0xf]
                %205 = vst [vmem:[%s195 + $0x10] sm:$0xf] %v204
                %v206 = vld [vmem:[%s194 + $0x28] sm:$0xf]
                %207 = vst [vmem:[%s195 + $0x14] sm:$0xf] %v206
                %v208 = vld [vmem:[%s194 + $0x30] sm:$0xf]
                %209 = vst [vmem:[%s195 + $0x18] sm:$0xf] %v208
                %v210 = vld [vmem:[%s194 + $0x38] sm:$0xf]
                %211 = vst [vmem:[%s195 + $0x1c] sm:$0xf] %v210
                %v212 = vld [vmem:[%s194 + $0x40] sm:$0xf]
                %213 = vst [vmem:[%s195 + $0x20] sm:$0xf] %v212
                %v214 = vld [vmem:[%s194 + $0x48] sm:$0xf]
                %215 = vst [vmem:[%s195 + $0x24] sm:$0xf] %v214
                %v216 = vld [vmem:[%s194 + $0x50] sm:$0xf]
                %217 = vst [vmem:[%s195 + $0x28] sm:$0xf] %v216
                %v218 = vld [vmem:[%s194 + $0x58] sm:$0xf]
                %219 = vst [vmem:[%s195 + $0x2c] sm:$0xf] %v218
                %v220 = vld [vmem:[%s194 + $0x60] sm:$0xf]
                %221 = vst [vmem:[%s195 + $0x30] sm:$0xf] %v220
                %v222 = vld [vmem:[%s194 + $0x68] sm:$0xf]
                %223 = vst [vmem:[%s195 + $0x34] sm:$0xf] %v222
                %v224 = vld [vmem:[%s194 + $0x70] sm:$0xf]
                %225 = vst [vmem:[%s195 + $0x38] sm:$0xf] %v224
                %v226 = vld [vmem:[%s194 + $0x78] sm:$0xf]
                %227 = vst [vmem:[%s195 + $0x3c] sm:$0xf] %v226
              $region45: #{graph_node_update_pallas.1} parent=39 // loop_footer
                %s193 = sadd.s32 1, %s189
              $region46: #{graph_node_update_pallas.1} parent=39 // loop_footer_branch
                %188 = sbr.rel target = $region42
              $region47: #{graph_node_update_pallas.1} parent=39 // loop_exit
                _
            $region40: #{graph_node_update_pallas.1} parent=31 // pred_fallthru
              _
          $region32: #{graph_node_update_pallas.1} parent=27 // pred_fallthru
            _
          %279 = vnop
        $region28: #{graph_node_update_pallas.1} parent=23 // pred_fallthru
          _
        // Predicated region
        $region66: #{graph_node_update_pallas.1} parent=23 // pred_check
          %p280 = pneg %p91
        $region67: #{graph_node_update_pallas.1} parent=23 // pred_check_branch
          %282 = sbr.rel (%p280) target = $region69
        $region68: #{graph_node_update_pallas.1} parent=23 // pred_region
          %s283 = smul.u32 16, %s17
          %p284 = scmp.lt.s32.totalorder %s283, 31
          %s285 = scalar_select %p284, %s283, 31
          %s286 = smul.addr %s285, 8
          %s287 = scalar_lea.vmem %s2, %s286
          %s288 = smul.u32 16, %s17
        $region69: #{graph_node_update_pallas.1} parent=23 // pred_fallthru
          _
      $region24: #{graph_node_update_pallas.1} parent=5 // pred_fallthru
        _
      %p289 = scmp.le.s32.totalorder 1, %s10
      %p290 = scmp.lt.s32.totalorder %s10, 5
      %p291 = pnand %p289, %p290
      %p292 = pneg %p291
      // Predicated region
      $region70: #{graph_node_update_pallas.1} parent=5 // pred_check
        _
      $region71: #{graph_node_update_pallas.1} parent=5 // pred_check_branch
        %294 = sbr.rel (%p291) target = $region73
      $region72: #{graph_node_update_pallas.1} parent=5 // pred_region
        %s295 = ssub.s32 %s10, 1
        %s296 = sand.u32 %s37, 1
        %s297 = sand.u32 %s37, 1
        %s298 = smul.addr %s297, 64
        %s299 = scalar_lea.vmem [#allocation3], %s298
        // Predicated region
        $region74: #{graph_node_update_pallas.1} parent=72 // pred_check
          %p300 = pneg %p50
        $region75: #{graph_node_update_pallas.1} parent=72 // pred_check_branch
          %302 = sbr.rel (%p300) target = $region77
        $region76: #{graph_node_update_pallas.1} parent=72 // pred_region
          _
        $region77: #{graph_node_update_pallas.1} parent=72 // pred_fallthru
          _
        %s303 = sand.u32 %s37, 1
        %s304 = sand.u32 %s37, 1
        %s305 = smul.addr %s304, 64
        %s306 = scalar_lea.vmem [#allocation3], %s305
        %p307 = pneg %p50
        %p308 = pneg %p47
        %p309 = pneg %p71
        %p310 = pneg %p68
        %s311 = smul.u32 16, %s19
        %p312 = scmp.lt.s32.totalorder %s311, 31
        %s313 = scalar_select %p312, %s311, 31
        %s314 = smul.addr %s313, 8
        %s315 = scalar_lea.vmem %s2, %s314
        %p316 = pneg %p97
        %p317 = pneg %p94
        %p318 = pneg %p118
        %p319 = pneg %p115
        %p320 = pneg %p144
        %p321 = pneg %p141
        %s322 = smul.u32 16, %s19
        %p323 = scmp.lt.s32.totalorder %s322, 31
        %s324 = scalar_select %p323, %s322, 31
        %s325 = smul.addr %s324, 8
        %s326 = scalar_lea.vmem %s4, %s325
        %s327 = smul.u32 16, %s19
        %s328 = smul.u32 16, %s19
        %p329 = scmp.lt.s32.totalorder %s328, 31
        %s330 = scalar_select %p329, %s328, 31
        %s331 = smul.addr %s330, 8
        %s332 = scalar_lea.vmem %s2, %s331
        %s333 = smul.u32 16, %s19
        %s334 = smul.u32 16, %s19
        %p335 = scmp.lt.s32.totalorder %s334, 31
        %s336 = scalar_select %p335, %s334, 31
        %s337 = smul.addr %s336, 8
        %s338 = scalar_lea.vmem %s4, %s337
        %s339 = smul.u32 16, %s19
        %p341 = scmp.eq.s32.totalorder %s20, 0
        // Predicated region
        $region78: #{graph_node_update_pallas.1} parent=72 // pred_check
          %p342 = pneg %p341
        $region79: #{graph_node_update_pallas.1} parent=72 // pred_check_branch
          %344 = sbr.rel (%p342) target = $region81
        $region80: #{graph_node_update_pallas.1} parent=72 // pred_region
          %vm345 = vcmask 261120
          %346 = vst.msk [vmem:[#allocation2] sm:$0xff] %vm345, 0.0
          %347 = vst.msk [vmem:[#allocation2 + $0x8] sm:$0xff] %vm345, 0.0
          %348 = vst.msk [vmem:[#allocation2 + $0x10] sm:$0xff] %vm345, 0.0
          %349 = vst.msk [vmem:[#allocation2 + $0x18] sm:$0xff] %vm345, 0.0
          %350 = vst.msk [vmem:[#allocation2 + $0x20] sm:$0xff] %vm345, 0.0
          %351 = vst.msk [vmem:[#allocation2 + $0x28] sm:$0xff] %vm345, 0.0
          %352 = vst.msk [vmem:[#allocation2 + $0x30] sm:$0xff] %vm345, 0.0
          %353 = vst.msk [vmem:[#allocation2 + $0x38] sm:$0xff] %vm345, 0.0
          %354 = vst.msk [vmem:[#allocation2 + $0x40] sm:$0xff] %vm345, 0.0
          %355 = vst.msk [vmem:[#allocation2 + $0x48] sm:$0xff] %vm345, 0.0
          %356 = vst.msk [vmem:[#allocation2 + $0x50] sm:$0xff] %vm345, 0.0
          %357 = vst.msk [vmem:[#allocation2 + $0x58] sm:$0xff] %vm345, 0.0
          %358 = vst.msk [vmem:[#allocation2 + $0x60] sm:$0xff] %vm345, 0.0
          %359 = vst.msk [vmem:[#allocation2 + $0x68] sm:$0xff] %vm345, 0.0
          %360 = vst.msk [vmem:[#allocation2 + $0x70] sm:$0xff] %vm345, 0.0
          %361 = vst.msk [vmem:[#allocation2 + $0x78] sm:$0xff] %vm345, 0.0
        $region81: #{graph_node_update_pallas.1} parent=72 // pred_fallthru
          _
        %s362 = smul.u32 %s20, 128
        %s363 = sshra.s32 %s362, 3
        %s364 = sand.u32 %s362, 7
        %s365 = smul.addr %s363, 4
        %s366 = scalar_lea.vmem %s1, %s365
        %v367 = vld [vmem:[%s366] sm:$0xf]
        %v368 = vld [vmem:[%s366 + $0x4] sm:$0xf]
        %v369 = vld [vmem:[%s366 + $0x8] sm:$0xf]
        %v370 = vld [vmem:[%s366 + $0xc] sm:$0xf]
        %v371 = vld [vmem:[%s366 + $0x10] sm:$0xf]
        %v372 = vld [vmem:[%s366 + $0x14] sm:$0xf]
        %v373 = vld [vmem:[%s366 + $0x18] sm:$0xf]
        %v374 = vld [vmem:[%s366 + $0x1c] sm:$0xf]
        %v375 = vld [vmem:[%s366 + $0x20] sm:$0xf]
        %v376 = vld [vmem:[%s366 + $0x24] sm:$0xf]
        %v377 = vld [vmem:[%s366 + $0x28] sm:$0xf]
        %v378 = vld [vmem:[%s366 + $0x2c] sm:$0xf]
        %v379 = vld [vmem:[%s366 + $0x30] sm:$0xf]
        %v380 = vld [vmem:[%s366 + $0x34] sm:$0xf]
        %v381 = vld [vmem:[%s366 + $0x38] sm:$0xf]
        %v382 = vld [vmem:[%s366 + $0x3c] sm:$0xf]
        %v383 = vld [vmem:[#allocation2] sm:$0xff]
        %v384 = vld [vmem:[#allocation2 + $0x8] sm:$0xff]
        %v385 = vld [vmem:[#allocation2 + $0x10] sm:$0xff]
        %v386 = vld [vmem:[#allocation2 + $0x18] sm:$0xff]
        %v387 = vld [vmem:[#allocation2 + $0x20] sm:$0xff]
        %v388 = vld [vmem:[#allocation2 + $0x28] sm:$0xff]
        %v389 = vld [vmem:[#allocation2 + $0x30] sm:$0xff]
        %v390 = vld [vmem:[#allocation2 + $0x38] sm:$0xff]
        %v391 = vld [vmem:[#allocation2 + $0x40] sm:$0xff]
        %v392 = vld [vmem:[#allocation2 + $0x48] sm:$0xff]
        %v393 = vld [vmem:[#allocation2 + $0x50] sm:$0xff]
        %v394 = vld [vmem:[#allocation2 + $0x58] sm:$0xff]
        %v395 = vld [vmem:[#allocation2 + $0x60] sm:$0xff]
        %v396 = vld [vmem:[#allocation2 + $0x68] sm:$0xff]
        %v397 = vld [vmem:[#allocation2 + $0x70] sm:$0xff]
        %v398 = vld [vmem:[#allocation2 + $0x78] sm:$0xff]
        %v399 = vld [vmem:[%s299] sm:$0xf]
        %v400 = vld [vmem:[%s299 + $0x4] sm:$0xf]
        %v401 = vld [vmem:[%s299 + $0x8] sm:$0xf]
        %v402 = vld [vmem:[%s299 + $0xc] sm:$0xf]
        %v403 = vld [vmem:[%s299 + $0x10] sm:$0xf]
        %v404 = vld [vmem:[%s299 + $0x14] sm:$0xf]
        %v405 = vld [vmem:[%s299 + $0x18] sm:$0xf]
        %v406 = vld [vmem:[%s299 + $0x1c] sm:$0xf]
        %v407 = vld [vmem:[%s299 + $0x20] sm:$0xf]
        %v408 = vld [vmem:[%s299 + $0x24] sm:$0xf]
        %v409 = vld [vmem:[%s299 + $0x28] sm:$0xf]
        %v410 = vld [vmem:[%s299 + $0x2c] sm:$0xf]
        %v411 = vld [vmem:[%s299 + $0x30] sm:$0xf]
        %v412 = vld [vmem:[%s299 + $0x34] sm:$0xf]
        %v413 = vld [vmem:[%s299 + $0x38] sm:$0xf]
        %v414 = vld [vmem:[%s299 + $0x3c] sm:$0xf]
        %v431 = vunpack.c.l.b16 %v399
        %v432 = vunpack.c.l.b16 %v400
        %v433 = vunpack.c.l.b16 %v401
        %v434 = vunpack.c.l.b16 %v402
        %v435 = vunpack.c.l.b16 %v403
        %v436 = vunpack.c.l.b16 %v404
        %v437 = vunpack.c.l.b16 %v405
        %v438 = vunpack.c.l.b16 %v406
        %v439 = vunpack.c.l.b16 %v407
        %v440 = vunpack.c.l.b16 %v408
        %v441 = vunpack.c.l.b16 %v409
        %v442 = vunpack.c.l.b16 %v410
        %v443 = vunpack.c.l.b16 %v411
        %v444 = vunpack.c.l.b16 %v412
        %v445 = vunpack.c.l.b16 %v413
        %v446 = vunpack.c.l.b16 %v414
        %v447 = vpack.c.b16 %v432, %v431
        %v448 = vpack.c.b16 %v434, %v433
        %v449 = vpack.c.b16 %v436, %v435
        %v450 = vpack.c.b16 %v438, %v437
        %v451 = vpack.c.b16 %v440, %v439
        %v452 = vpack.c.b16 %v442, %v441
        %v453 = vpack.c.b16 %v444, %v443
        %v454 = vpack.c.b16 %v446, %v445
        %v479 = vunpack.c.l.b16 %v367
        %v480 = vunpack.c.l.b16 %v368
        %v481 = vunpack.c.l.b16 %v369
        %v482 = vunpack.c.l.b16 %v370
        %v483 = vunpack.c.l.b16 %v371
        %v484 = vunpack.c.l.b16 %v372
        %v485 = vunpack.c.l.b16 %v373
        %v486 = vunpack.c.l.b16 %v374
        %v487 = vunpack.c.l.b16 %v375
        %v488 = vunpack.c.l.b16 %v376
        %v489 = vunpack.c.l.b16 %v377
        %v490 = vunpack.c.l.b16 %v378
        %v491 = vunpack.c.l.b16 %v379
        %v492 = vunpack.c.l.b16 %v380
        %v493 = vunpack.c.l.b16 %v381
        %v494 = vunpack.c.l.b16 %v382
        %v495 = vpack.c.b16 %v480, %v479
        %v496 = vpack.c.b16 %v482, %v481
        %v497 = vpack.c.b16 %v484, %v483
        %v498 = vpack.c.b16 %v486, %v485
        %v499 = vpack.c.b16 %v488, %v487
        %v500 = vpack.c.b16 %v490, %v489
        %v501 = vpack.c.b16 %v492, %v491
        %v502 = vpack.c.b16 %v494, %v493
        %511 = vmatprep.subr.bf16.mxu0 0
        %512 = vmatpush1.bf16.msra.mxu0 %v495
        %513 = vmatprep.subr.bf16.mxu0 0
        %514 = vmatpush1.bf16.msra.mxu0 %v496
        %515 = vmatprep.subr.bf16.mxu0 0
        %516 = vmatpush1.bf16.msra.mxu0 %v497
        %517 = vmatprep.subr.bf16.mxu0 0
        %518 = vmatpush1.bf16.msra.mxu0 %v498
        %519 = vmatprep.subr.bf16.mxu0 0
        %520 = vmatpush1.bf16.msra.mxu0 %v499
        %521 = vmatprep.subr.bf16.mxu0 0
        %522 = vmatpush1.bf16.msra.mxu0 %v500
        %523 = vmatprep.subr.bf16.mxu0 0
        %524 = vmatpush1.bf16.msra.mxu0 %v501
        %525 = vmatprep.subr.bf16.mxu0 0
        %526 = vmatpush1.bf16.msra.mxu0 %v502
        %527 = vmatprep.subr.bf16.mxu0 0
        %528 = vmatpush1.bf16.msra.mxu0 0
        %529 = vmatprep.subr.bf16.mxu0 0
        %530 = vmatpush1.bf16.msra.mxu0 0
        %531 = vmatprep.subr.bf16.mxu0 0
        %532 = vmatpush1.bf16.msra.mxu0 0
        %533 = vmatprep.subr.bf16.mxu0 0
        %534 = vmatpush1.bf16.msra.mxu0 0
        %535 = vmatprep.subr.bf16.mxu0 0
        %536 = vmatpush1.bf16.msra.mxu0 0
        %537 = vmatprep.subr.bf16.mxu0 0
        %538 = vmatpush1.bf16.msra.mxu0 0
        %539 = vmatprep.subr.bf16.mxu0 0
        %540 = vmatpush1.bf16.msra.mxu0 0
        %541 = vmatprep.subr.bf16.mxu0 0
        %542 = vmatpush1.bf16.msra.mxu0 0
        %543 = vmatprep.mubr.bf16.mxu0 0
        %544 = vmatmul.mubr.bf16.gmra.mrb[0].mxu0 %v447
        %v545 = vpop.f32.mrb[0].mxu0
        %v546 = vadd.f32 0.0, %v545
        %v547 = vpop.f32.mrb[0].mxu0
        %v548 = vpop.f32.mrb[0].mxu0
        %v549 = vadd.f32 0.0, %v548
        %v550 = vpop.f32.mrb[0].mxu0
        %551 = vmatprep.mubr.bf16.mxu0 0
        %552 = vmatmul.mubr.bf16.gmra.mrb[0].mxu0 %v448
        %v553 = vpop.f32.mrb[0].mxu0
        %v554 = vadd.f32 0.0, %v553
        %v555 = vpop.f32.mrb[0].mxu0
        %v556 = vpop.f32.mrb[0].mxu0
        %v557 = vadd.f32 0.0, %v556
        %v558 = vpop.f32.mrb[0].mxu0
        %559 = vmatprep.mubr.bf16.mxu0 0
        %560 = vmatmul.mubr.bf16.gmra.mrb[0].mxu0 %v449
        %v561 = vpop.f32.mrb[0].mxu0
        %v562 = vadd.f32 0.0, %v561
        %v563 = vpop.f32.mrb[0].mxu0
        %v564 = vpop.f32.mrb[0].mxu0
        %v565 = vadd.f32 0.0, %v564
        %v566 = vpop.f32.mrb[0].mxu0
        %567 = vmatprep.mubr.bf16.mxu0 0
        %568 = vmatmul.mubr.bf16.gmra.mrb[0].mxu0 %v450
        %v569 = vpop.f32.mrb[0].mxu0
        %v570 = vadd.f32 0.0, %v569
        %v571 = vpop.f32.mrb[0].mxu0
        %v572 = vpop.f32.mrb[0].mxu0
        %v573 = vadd.f32 0.0, %v572
        %v574 = vpop.f32.mrb[0].mxu0
        %575 = vmatprep.mubr.bf16.mxu0 0
        %576 = vmatmul.mubr.bf16.gmra.mrb[0].mxu0 %v451
        %v577 = vpop.f32.mrb[0].mxu0
        %v578 = vadd.f32 0.0, %v577
        %v579 = vpop.f32.mrb[0].mxu0
        %v580 = vpop.f32.mrb[0].mxu0
        %v581 = vadd.f32 0.0, %v580
        %v582 = vpop.f32.mrb[0].mxu0
        %583 = vmatprep.mubr.bf16.mxu0 0
        %584 = vmatmul.mubr.bf16.gmra.mrb[0].mxu0 %v452
        %v585 = vpop.f32.mrb[0].mxu0
        %v586 = vadd.f32 0.0, %v585
        %v587 = vpop.f32.mrb[0].mxu0
        %v588 = vpop.f32.mrb[0].mxu0
        %v589 = vadd.f32 0.0, %v588
        %v590 = vpop.f32.mrb[0].mxu0
        %591 = vmatprep.mubr.bf16.mxu0 0
        %592 = vmatmul.mubr.bf16.gmra.mrb[0].mxu0 %v453
        %v593 = vpop.f32.mrb[0].mxu0
        %v594 = vadd.f32 0.0, %v593
        %v595 = vpop.f32.mrb[0].mxu0
        %v596 = vpop.f32.mrb[0].mxu0
        %v597 = vadd.f32 0.0, %v596
        %v598 = vpop.f32.mrb[0].mxu0
        %599 = vmatprep.mubr.bf16.mxu0 0
        %600 = vmatmul.mubr.bf16.gmra.mrb[0].mxu0 %v454
        %v601 = vpop.f32.mrb[0].mxu0
        %v602 = vadd.f32 0.0, %v601
        %v603 = vpop.f32.mrb[0].mxu0
        %v604 = vpop.f32.mrb[0].mxu0
        %v605 = vadd.f32 0.0, %v604
        %v606 = vpop.f32.mrb[0].mxu0
        %607 = vdwg.mxu0
        %v608 = vadd.f32 %v383, %v546
        %v609 = vadd.f32 %v384, %v549
        %v610 = vadd.f32 %v385, %v554
        %v611 = vadd.f32 %v386, %v557
        %v612 = vadd.f32 %v387, %v562
        %v613 = vadd.f32 %v388, %v565
        %v614 = vadd.f32 %v389, %v570
        %v615 = vadd.f32 %v390, %v573
        %v616 = vadd.f32 %v391, %v578
        %v617 = vadd.f32 %v392, %v581
        %v618 = vadd.f32 %v393, %v586
        %v619 = vadd.f32 %v394, %v589
        %v620 = vadd.f32 %v395, %v594
        %v621 = vadd.f32 %v396, %v597
        %v622 = vadd.f32 %v397, %v602
        %v623 = vadd.f32 %v398, %v605
        %vm624 = vcmask 261120
        %625 = vst.msk [vmem:[#allocation2] sm:$0xff] %vm624, %v608
        %626 = vst.msk [vmem:[#allocation2 + $0x8] sm:$0xff] %vm624, %v609
        %627 = vst.msk [vmem:[#allocation2 + $0x10] sm:$0xff] %vm624, %v610
        %628 = vst.msk [vmem:[#allocation2 + $0x18] sm:$0xff] %vm624, %v611
        %629 = vst.msk [vmem:[#allocation2 + $0x20] sm:$0xff] %vm624, %v612
        %630 = vst.msk [vmem:[#allocation2 + $0x28] sm:$0xff] %vm624, %v613
        %631 = vst.msk [vmem:[#allocation2 + $0x30] sm:$0xff] %vm624, %v614
        %632 = vst.msk [vmem:[#allocation2 + $0x38] sm:$0xff] %vm624, %v615
        %633 = vst.msk [vmem:[#allocation2 + $0x40] sm:$0xff] %vm624, %v616
        %634 = vst.msk [vmem:[#allocation2 + $0x48] sm:$0xff] %vm624, %v617
        %635 = vst.msk [vmem:[#allocation2 + $0x50] sm:$0xff] %vm624, %v618
        %636 = vst.msk [vmem:[#allocation2 + $0x58] sm:$0xff] %vm624, %v619
        %637 = vst.msk [vmem:[#allocation2 + $0x60] sm:$0xff] %vm624, %v620
        %638 = vst.msk [vmem:[#allocation2 + $0x68] sm:$0xff] %vm624, %v621
        %639 = vst.msk [vmem:[#allocation2 + $0x70] sm:$0xff] %vm624, %v622
        %640 = vst.msk [vmem:[#allocation2 + $0x78] sm:$0xff] %vm624, %v623
        %p641 = scmp.eq.s32.totalorder %s20, 1
        // Predicated region
        $region82: #{graph_node_update_pallas.1} parent=72 // pred_check
          %p642 = pneg %p641
        $region83: #{graph_node_update_pallas.1} parent=72 // pred_check_branch
          %644 = sbr.rel (%p642) target = $region85
        $region84: #{graph_node_update_pallas.1} parent=72 // pred_region
          %v645 = vld [vmem:[%s332] sm:$0xff]
          %v646 = vld [vmem:[%s332 + $0x8] sm:$0xff]
          %v647 = vld [vmem:[%s332 + $0x10] sm:$0xff]
          %v648 = vld [vmem:[%s332 + $0x18] sm:$0xff]
          %v649 = vld [vmem:[%s332 + $0x20] sm:$0xff]
          %v650 = vld [vmem:[%s332 + $0x28] sm:$0xff]
          %v651 = vld [vmem:[%s332 + $0x30] sm:$0xff]
          %v652 = vld [vmem:[%s332 + $0x38] sm:$0xff]
          %v653 = vld [vmem:[%s332 + $0x40] sm:$0xff]
          %v654 = vld [vmem:[%s332 + $0x48] sm:$0xff]
          %v655 = vld [vmem:[%s332 + $0x50] sm:$0xff]
          %v656 = vld [vmem:[%s332 + $0x58] sm:$0xff]
          %v657 = vld [vmem:[%s332 + $0x60] sm:$0xff]
          %v658 = vld [vmem:[%s332 + $0x68] sm:$0xff]
          %v659 = vld [vmem:[%s332 + $0x70] sm:$0xff]
          %v660 = vld [vmem:[%s332 + $0x78] sm:$0xff]
          %v661 = vld [vmem:[%s3] sm:$0xff]
          %v662 = vld [vmem:[%s3 + $0x8] sm:$0xff]
          %v663 = vld [vmem:[%s3 + $0x10] sm:$0xff]
          %v664 = vld [vmem:[%s3 + $0x18] sm:$0xff]
          %v666 = vsel %vm624, %v645, 0
          %v669 = vsel %vm624, %v646, 0
          %v672 = vsel %vm624, %v647, 0
          %v675 = vsel %vm624, %v648, 0
          %v678 = vsel %vm624, %v649, 0
          %v681 = vsel %vm624, %v650, 0
          %v684 = vsel %vm624, %v651, 0
          %v687 = vsel %vm624, %v652, 0
          %v690 = vsel %vm624, %v653, 0
          %v693 = vsel %vm624, %v654, 0
          %v696 = vsel %vm624, %v655, 0
          %v699 = vsel %vm624, %v656, 0
          %v702 = vsel %vm624, %v657, 0
          %v705 = vsel %vm624, %v658, 0
          %v708 = vsel %vm624, %v659, 0
          %v711 = vsel %vm624, %v660, 0
          %713 = vmatprep.subr.mxu0 0.0
          %714 = vmatpush1.msra.mxu0 %v661
          %715 = vmatprep.subr.mxu0 0.0
          %716 = vmatpush1.msra.mxu0 %v662
          %717 = vmatprep.subr.mxu0 0.0
          %718 = vmatpush1.msra.mxu0 %v663
          %719 = vmatprep.subr.mxu0 0.0
          %720 = vmatpush1.msra.mxu0 %v664
          %721 = vmatprep.subr.mxu0 0.0
          %722 = vmatpush1.msra.mxu0 0.0
          %723 = vmatprep.subr.mxu0 0.0
          %724 = vmatpush1.msra.mxu0 0.0
          %725 = vmatprep.subr.mxu0 0.0
          %726 = vmatpush1.msra.mxu0 0.0
          %727 = vmatprep.subr.mxu0 0.0
          %728 = vmatpush1.msra.mxu0 0.0
          %729 = vmatprep.subr.mxu0 0.0
          %730 = vmatpush1.msra.mxu0 0.0
          %731 = vmatprep.subr.mxu0 0.0
          %732 = vmatpush1.msra.mxu0 0.0
          %733 = vmatprep.subr.mxu0 0.0
          %734 = vmatpush1.msra.mxu0 0.0
          %735 = vmatprep.subr.mxu0 0.0
          %736 = vmatpush1.msra.mxu0 0.0
          %737 = vmatprep.subr.mxu0 0.0
          %738 = vmatpush1.msra.mxu0 0.0
          %739 = vmatprep.subr.mxu0 0.0
          %740 = vmatpush1.msra.mxu0 0.0
          %741 = vmatprep.subr.mxu0 0.0
          %742 = vmatpush1.msra.mxu0 0.0
          %743 = vmatprep.subr.mxu0 0.0
          %744 = vmatpush1.msra.mxu0 0.0
          %745 = vmatprep.subr.mxu0 0.0
          %746 = vmatpush1.msra.mxu0 0.0
          %747 = vmatprep.subr.mxu0 0.0
          %748 = vmatpush1.msra.mxu0 0.0
          %749 = vmatprep.subr.mxu0 0.0
          %750 = vmatpush1.msra.mxu0 0.0
          %751 = vmatprep.subr.mxu0 0.0
          %752 = vmatpush1.msra.mxu0 0.0
          %753 = vmatprep.subr.mxu0 0.0
          %754 = vmatpush1.msra.mxu0 0.0
          %755 = vmatprep.subr.mxu0 0.0
          %756 = vmatpush1.msra.mxu0 0.0
          %757 = vmatprep.subr.mxu0 0.0
          %758 = vmatpush1.msra.mxu0 0.0
          %759 = vmatprep.subr.mxu0 0.0
          %760 = vmatpush1.msra.mxu0 0.0
          %761 = vmatprep.subr.mxu0 0.0
          %762 = vmatpush1.msra.mxu0 0.0
          %763 = vmatprep.subr.mxu0 0.0
          %764 = vmatpush1.msra.mxu0 0.0
          %765 = vmatprep.subr.mxu0 0.0
          %766 = vmatpush1.msra.mxu0 0.0
          %767 = vmatprep.subr.mxu0 0.0
          %768 = vmatpush1.msra.mxu0 0.0
          %769 = vmatprep.subr.mxu0 0.0
          %770 = vmatpush1.msra.mxu0 0.0
          %771 = vmatprep.subr.mxu0 0.0
          %772 = vmatpush1.msra.mxu0 0.0
          %773 = vmatprep.subr.mxu0 0.0
          %774 = vmatpush1.msra.mxu0 0.0
          %775 = vmatprep.subr.mxu0 0.0
          %776 = vmatpush1.msra.mxu0 0.0
          %777 = vmatprep.mubr.f32.mxu0 0.0
          %778 = vmatmul.mubr.f32.gmra.mrb[0].mxu0 %v666
          %v779 = vpop.f32.mrb[0].mxu0
          %v780 = vadd.f32 0.0, %v779
          %v781 = vpop.f32.mrb[0].mxu0
          %782 = vmatprep.mubr.f32.mxu0 0.0
          %783 = vmatmul.mubr.f32.gmra.mrb[0].mxu0 %v669
          %v784 = vpop.f32.mrb[0].mxu0
          %v785 = vadd.f32 0.0, %v784
          %v786 = vpop.f32.mrb[0].mxu0
          %787 = vmatprep.mubr.f32.mxu0 0.0
          %788 = vmatmul.mubr.f32.gmra.mrb[0].mxu0 %v672
          %v789 = vpop.f32.mrb[0].mxu0
          %v790 = vadd.f32 0.0, %v789
          %v791 = vpop.f32.mrb[0].mxu0
          %792 = vmatprep.mubr.f32.mxu0 0.0
          %793 = vmatmul.mubr.f32.gmra.mrb[0].mxu0 %v675
          %v794 = vpop.f32.mrb[0].mxu0
          %v795 = vadd.f32 0.0, %v794
          %v796 = vpop.f32.mrb[0].mxu0
          %797 = vmatprep.mubr.f32.mxu0 0.0
          %798 = vmatmul.mubr.f32.gmra.mrb[0].mxu0 %v678
          %v799 = vpop.f32.mrb[0].mxu0
          %v800 = vadd.f32 0.0, %v799
          %v801 = vpop.f32.mrb[0].mxu0
          %802 = vmatprep.mubr.f32.mxu0 0.0
          %803 = vmatmul.mubr.f32.gmra.mrb[0].mxu0 %v681
          %v804 = vpop.f32.mrb[0].mxu0
          %v805 = vadd.f32 0.0, %v804
          %v806 = vpop.f32.mrb[0].mxu0
          %807 = vmatprep.mubr.f32.mxu0 0.0
          %808 = vmatmul.mubr.f32.gmra.mrb[0].mxu0 %v684
          %v809 = vpop.f32.mrb[0].mxu0
          %v810 = vadd.f32 0.0, %v809
          %v811 = vpop.f32.mrb[0].mxu0
          %812 = vmatprep.mubr.f32.mxu0 0.0
          %813 = vmatmul.mubr.f32.gmra.mrb[0].mxu0 %v687
          %v814 = vpop.f32.mrb[0].mxu0
          %v815 = vadd.f32 0.0, %v814
          %v816 = vpop.f32.mrb[0].mxu0
          %817 = vmatprep.mubr.f32.mxu0 0.0
          %818 = vmatmul.mubr.f32.gmra.mrb[0].mxu0 %v690
          %v819 = vpop.f32.mrb[0].mxu0
          %v820 = vadd.f32 0.0, %v819
          %v821 = vpop.f32.mrb[0].mxu0
          %822 = vmatprep.mubr.f32.mxu0 0.0
          %823 = vmatmul.mubr.f32.gmra.mrb[0].mxu0 %v693
          %v824 = vpop.f32.mrb[0].mxu0
          %v825 = vadd.f32 0.0, %v824
          %v826 = vpop.f32.mrb[0].mxu0
          %827 = vmatprep.mubr.f32.mxu0 0.0
          %828 = vmatmul.mubr.f32.gmra.mrb[0].mxu0 %v696
          %v829 = vpop.f32.mrb[0].mxu0
          %v830 = vadd.f32 0.0, %v829
          %v831 = vpop.f32.mrb[0].mxu0
          %832 = vmatprep.mubr.f32.mxu0 0.0
          %833 = vmatmul.mubr.f32.gmra.mrb[0].mxu0 %v699
          %v834 = vpop.f32.mrb[0].mxu0
          %v835 = vadd.f32 0.0, %v834
          %v836 = vpop.f32.mrb[0].mxu0
          %837 = vmatprep.mubr.f32.mxu0 0.0
          %838 = vmatmul.mubr.f32.gmra.mrb[0].mxu0 %v702
          %v839 = vpop.f32.mrb[0].mxu0
          %v840 = vadd.f32 0.0, %v839
          %v841 = vpop.f32.mrb[0].mxu0
          %842 = vmatprep.mubr.f32.mxu0 0.0
          %843 = vmatmul.mubr.f32.gmra.mrb[0].mxu0 %v705
          %v844 = vpop.f32.mrb[0].mxu0
          %v845 = vadd.f32 0.0, %v844
          %v846 = vpop.f32.mrb[0].mxu0
          %847 = vmatprep.mubr.f32.mxu0 0.0
          %848 = vmatmul.mubr.f32.gmra.mrb[0].mxu0 %v708
          %v849 = vpop.f32.mrb[0].mxu0
          %v850 = vadd.f32 0.0, %v849
          %v851 = vpop.f32.mrb[0].mxu0
          %852 = vmatprep.mubr.f32.mxu0 0.0
          %853 = vmatmul.mubr.f32.gmra.mrb[0].mxu0 %v711
          %v854 = vpop.f32.mrb[0].mxu0
          %v855 = vadd.f32 0.0, %v854
          %v856 = vpop.f32.mrb[0].mxu0
          %857 = vdwg.mxu0
          %v858 = vld [vmem:[#allocation2] sm:$0xff]
          %v859 = vld [vmem:[#allocation2 + $0x8] sm:$0xff]
          %v860 = vld [vmem:[#allocation2 + $0x10] sm:$0xff]
          %v861 = vld [vmem:[#allocation2 + $0x18] sm:$0xff]
          %v862 = vld [vmem:[#allocation2 + $0x20] sm:$0xff]
          %v863 = vld [vmem:[#allocation2 + $0x28] sm:$0xff]
          %v864 = vld [vmem:[#allocation2 + $0x30] sm:$0xff]
          %v865 = vld [vmem:[#allocation2 + $0x38] sm:$0xff]
          %v866 = vld [vmem:[#allocation2 + $0x40] sm:$0xff]
          %v867 = vld [vmem:[#allocation2 + $0x48] sm:$0xff]
          %v868 = vld [vmem:[#allocation2 + $0x50] sm:$0xff]
          %v869 = vld [vmem:[#allocation2 + $0x58] sm:$0xff]
          %v870 = vld [vmem:[#allocation2 + $0x60] sm:$0xff]
          %v871 = vld [vmem:[#allocation2 + $0x68] sm:$0xff]
          %v872 = vld [vmem:[#allocation2 + $0x70] sm:$0xff]
          %v873 = vld [vmem:[#allocation2 + $0x78] sm:$0xff]
          %v874 = vadd.f32 %v858, %v780
          %v875 = vadd.f32 %v859, %v785
          %v876 = vadd.f32 %v860, %v790
          %v877 = vadd.f32 %v861, %v795
          %v878 = vadd.f32 %v862, %v800
          %v879 = vadd.f32 %v863, %v805
          %v880 = vadd.f32 %v864, %v810
          %v881 = vadd.f32 %v865, %v815
          %v882 = vadd.f32 %v866, %v820
          %v883 = vadd.f32 %v867, %v825
          %v884 = vadd.f32 %v868, %v830
          %v885 = vadd.f32 %v869, %v835
          %v886 = vadd.f32 %v870, %v840
          %v887 = vadd.f32 %v871, %v845
          %v888 = vadd.f32 %v872, %v850
          %v889 = vadd.f32 %v873, %v855
          %v890 = vadd.f32 %v874, 1e-06
          %v891 = vadd.f32 %v875, 1e-06
          %v892 = vadd.f32 %v876, 1e-06
          %v893 = vadd.f32 %v877, 1e-06
          %v894 = vadd.f32 %v878, 1e-06
          %v895 = vadd.f32 %v879, 1e-06
          %v896 = vadd.f32 %v880, 1e-06
          %v897 = vadd.f32 %v881, 1e-06
          %v898 = vadd.f32 %v882, 1e-06
          %v899 = vadd.f32 %v883, 1e-06
          %v900 = vadd.f32 %v884, 1e-06
          %v901 = vadd.f32 %v885, 1e-06
          %v902 = vadd.f32 %v886, 1e-06
          %v903 = vadd.f32 %v887, 1e-06
          %v904 = vadd.f32 %v888, 1e-06
          %v905 = vadd.f32 %v889, 1e-06
          %v906 = vsel %vm624, %v890, 0.0
          %907 = vadd.xlane.f32.xlu0 %v906
          %v908 = vpop.xlane.xlu0 %907
          %v909 = vsel %vm624, %v891, 0.0
          %910 = vadd.xlane.f32.xlu0 %v909
          %v911 = vpop.xlane.xlu0 %910
          %v912 = vsel %vm624, %v892, 0.0
          %913 = vadd.xlane.f32.xlu0 %v912
          %v914 = vpop.xlane.xlu0 %913
          %v915 = vsel %vm624, %v893, 0.0
          %916 = vadd.xlane.f32.xlu0 %v915
          %v917 = vpop.xlane.xlu0 %916
          %v918 = vsel %vm624, %v894, 0.0
          %919 = vadd.xlane.f32.xlu0 %v918
          %v920 = vpop.xlane.xlu0 %919
          %v921 = vsel %vm624, %v895, 0.0
          %922 = vadd.xlane.f32.xlu0 %v921
          %v923 = vpop.xlane.xlu0 %922
          %v924 = vsel %vm624, %v896, 0.0
          %925 = vadd.xlane.f32.xlu0 %v924
          %v926 = vpop.xlane.xlu0 %925
          %v927 = vsel %vm624, %v897, 0.0
          %928 = vadd.xlane.f32.xlu0 %v927
          %v929 = vpop.xlane.xlu0 %928
          %v930 = vsel %vm624, %v898, 0.0
          %931 = vadd.xlane.f32.xlu0 %v930
          %v932 = vpop.xlane.xlu0 %931
          %v933 = vsel %vm624, %v899, 0.0
          %934 = vadd.xlane.f32.xlu0 %v933
          %v935 = vpop.xlane.xlu0 %934
          %v936 = vsel %vm624, %v900, 0.0
          %937 = vadd.xlane.f32.xlu0 %v936
          %v938 = vpop.xlane.xlu0 %937
          %v939 = vsel %vm624, %v901, 0.0
          %940 = vadd.xlane.f32.xlu0 %v939
          %v941 = vpop.xlane.xlu0 %940
          %v942 = vsel %vm624, %v902, 0.0
          %943 = vadd.xlane.f32.xlu0 %v942
          %v944 = vpop.xlane.xlu0 %943
          %v945 = vsel %vm624, %v903, 0.0
          %946 = vadd.xlane.f32.xlu0 %v945
          %v947 = vpop.xlane.xlu0 %946
          %v948 = vsel %vm624, %v904, 0.0
          %949 = vadd.xlane.f32.xlu0 %v948
          %v950 = vpop.xlane.xlu0 %949
          %v951 = vsel %vm624, %v905, 0.0
          %952 = vadd.xlane.f32.xlu0 %v951
          %v953 = vpop.xlane.xlu0 %952
          %v954 = vrcp.pop 32.0
          %v955 = vmul.f32 %v908, %v954
          %v956 = vmul.f32 %v911, %v954
          %v957 = vmul.f32 %v914, %v954
          %v958 = vmul.f32 %v917, %v954
          %v959 = vmul.f32 %v920, %v954
          %v960 = vmul.f32 %v923, %v954
          %v961 = vmul.f32 %v926, %v954
          %v962 = vmul.f32 %v929, %v954
          %v963 = vmul.f32 %v932, %v954
          %v964 = vmul.f32 %v935, %v954
          %v965 = vmul.f32 %v938, %v954
          %v966 = vmul.f32 %v941, %v954
          %v967 = vmul.f32 %v944, %v954
          %v968 = vmul.f32 %v947, %v954
          %v969 = vmul.f32 %v950, %v954
          %v970 = vmul.f32 %v953, %v954
          %v971 = vsub.f32 %v890, %v955
          %v972 = vsub.f32 %v891, %v956
          %v973 = vsub.f32 %v892, %v957
          %v974 = vsub.f32 %v893, %v958
          %v975 = vsub.f32 %v894, %v959
          %v976 = vsub.f32 %v895, %v960
          %v977 = vsub.f32 %v896, %v961
          %v978 = vsub.f32 %v897, %v962
          %v979 = vsub.f32 %v898, %v963
          %v980 = vsub.f32 %v899, %v964
          %v981 = vsub.f32 %v900, %v965
          %v982 = vsub.f32 %v901, %v966
          %v983 = vsub.f32 %v902, %v967
          %v984 = vsub.f32 %v903, %v968
          %v985 = vsub.f32 %v904, %v969
          %v986 = vsub.f32 %v905, %v970
          %v987 = vmul.f32 %v971, %v971
          %v988 = vmul.f32 %v972, %v972
          %v989 = vmul.f32 %v973, %v973
          %v990 = vmul.f32 %v974, %v974
          %v991 = vmul.f32 %v975, %v975
          %v992 = vmul.f32 %v976, %v976
          %v993 = vmul.f32 %v977, %v977
          %v994 = vmul.f32 %v978, %v978
          %v995 = vmul.f32 %v979, %v979
          %v996 = vmul.f32 %v980, %v980
          %v997 = vmul.f32 %v981, %v981
          %v998 = vmul.f32 %v982, %v982
          %v999 = vmul.f32 %v983, %v983
          %v1000 = vmul.f32 %v984, %v984
          %v1001 = vmul.f32 %v985, %v985
          %v1002 = vmul.f32 %v986, %v986
          %v1003 = vsel %vm624, %v987, 0.0
          %1004 = vadd.xlane.f32.xlu0 %v1003
          %v1005 = vpop.xlane.xlu0 %1004
          %v1006 = vsel %vm624, %v988, 0.0
          %1007 = vadd.xlane.f32.xlu0 %v1006
          %v1008 = vpop.xlane.xlu0 %1007
          %v1009 = vsel %vm624, %v989, 0.0
          %1010 = vadd.xlane.f32.xlu0 %v1009
          %v1011 = vpop.xlane.xlu0 %1010
          %v1012 = vsel %vm624, %v990, 0.0
          %1013 = vadd.xlane.f32.xlu0 %v1012
          %v1014 = vpop.xlane.xlu0 %1013
          %v1015 = vsel %vm624, %v991, 0.0
          %1016 = vadd.xlane.f32.xlu0 %v1015
          %v1017 = vpop.xlane.xlu0 %1016
          %v1018 = vsel %vm624, %v992, 0.0
          %1019 = vadd.xlane.f32.xlu0 %v1018
          %v1020 = vpop.xlane.xlu0 %1019
          %v1021 = vsel %vm624, %v993, 0.0
          %1022 = vadd.xlane.f32.xlu0 %v1021
          %v1023 = vpop.xlane.xlu0 %1022
          %v1024 = vsel %vm624, %v994, 0.0
          %1025 = vadd.xlane.f32.xlu0 %v1024
          %v1026 = vpop.xlane.xlu0 %1025
          %v1027 = vsel %vm624, %v995, 0.0
          %1028 = vadd.xlane.f32.xlu0 %v1027
          %v1029 = vpop.xlane.xlu0 %1028
          %v1030 = vsel %vm624, %v996, 0.0
          %1031 = vadd.xlane.f32.xlu0 %v1030
          %v1032 = vpop.xlane.xlu0 %1031
          %v1033 = vsel %vm624, %v997, 0.0
          %1034 = vadd.xlane.f32.xlu0 %v1033
          %v1035 = vpop.xlane.xlu0 %1034
          %v1036 = vsel %vm624, %v998, 0.0
          %1037 = vadd.xlane.f32.xlu0 %v1036
          %v1038 = vpop.xlane.xlu0 %1037
          %v1039 = vsel %vm624, %v999, 0.0
          %1040 = vadd.xlane.f32.xlu0 %v1039
          %v1041 = vpop.xlane.xlu0 %1040
          %v1042 = vsel %vm624, %v1000, 0.0
          %1043 = vadd.xlane.f32.xlu0 %v1042
          %v1044 = vpop.xlane.xlu0 %1043
          %v1045 = vsel %vm624, %v1001, 0.0
          %1046 = vadd.xlane.f32.xlu0 %v1045
          %v1047 = vpop.xlane.xlu0 %1046
          %v1048 = vsel %vm624, %v1002, 0.0
          %1049 = vadd.xlane.f32.xlu0 %v1048
          %v1050 = vpop.xlane.xlu0 %1049
          %v1051 = vmul.f32 %v1005, %v954
          %v1052 = vmul.f32 %v1008, %v954
          %v1053 = vmul.f32 %v1011, %v954
          %v1054 = vmul.f32 %v1014, %v954
          %v1055 = vmul.f32 %v1017, %v954
          %v1056 = vmul.f32 %v1020, %v954
          %v1057 = vmul.f32 %v1023, %v954
          %v1058 = vmul.f32 %v1026, %v954
          %v1059 = vmul.f32 %v1029, %v954
          %v1060 = vmul.f32 %v1032, %v954
          %v1061 = vmul.f32 %v1035, %v954
          %v1062 = vmul.f32 %v1038, %v954
          %v1063 = vmul.f32 %v1041, %v954
          %v1064 = vmul.f32 %v1044, %v954
          %v1065 = vmul.f32 %v1047, %v954
          %v1066 = vmul.f32 %v1050, %v954
          %v1067 = vadd.f32 %v1051, 1e-05
          %v1068 = vadd.f32 %v1052, 1e-05
          %v1069 = vadd.f32 %v1053, 1e-05
          %v1070 = vadd.f32 %v1054, 1e-05
          %v1071 = vadd.f32 %v1055, 1e-05
          %v1072 = vadd.f32 %v1056, 1e-05
          %v1073 = vadd.f32 %v1057, 1e-05
          %v1074 = vadd.f32 %v1058, 1e-05
          %v1075 = vadd.f32 %v1059, 1e-05
          %v1076 = vadd.f32 %v1060, 1e-05
          %v1077 = vadd.f32 %v1061, 1e-05
          %v1078 = vadd.f32 %v1062, 1e-05
          %v1079 = vadd.f32 %v1063, 1e-05
          %v1080 = vadd.f32 %v1064, 1e-05
          %v1081 = vadd.f32 %v1065, 1e-05
          %v1082 = vadd.f32 %v1066, 1e-05
          %v1083 = vrsqrt.pop %v1067
          %v1084 = vrsqrt.pop %v1068
          %v1085 = vrsqrt.pop %v1069
          %v1086 = vrsqrt.pop %v1070
          %v1087 = vrsqrt.pop %v1071
          %v1088 = vrsqrt.pop %v1072
          %v1089 = vrsqrt.pop %v1073
          %v1090 = vrsqrt.pop %v1074
          %v1091 = vrsqrt.pop %v1075
          %v1092 = vrsqrt.pop %v1076
          %v1093 = vrsqrt.pop %v1077
          %v1094 = vrsqrt.pop %v1078
          %v1095 = vrsqrt.pop %v1079
          %v1096 = vrsqrt.pop %v1080
          %v1097 = vrsqrt.pop %v1081
          %v1098 = vrsqrt.pop %v1082
          %v1099 = vmul.f32 %v971, %v1083
          %v1100 = vmul.f32 %v972, %v1084
          %v1101 = vmul.f32 %v973, %v1085
          %v1102 = vmul.f32 %v974, %v1086
          %v1103 = vmul.f32 %v975, %v1087
          %v1104 = vmul.f32 %v976, %v1088
          %v1105 = vmul.f32 %v977, %v1089
          %v1106 = vmul.f32 %v978, %v1090
          %v1107 = vmul.f32 %v979, %v1091
          %v1108 = vmul.f32 %v980, %v1092
          %v1109 = vmul.f32 %v981, %v1093
          %v1110 = vmul.f32 %v982, %v1094
          %v1111 = vmul.f32 %v983, %v1095
          %v1112 = vmul.f32 %v984, %v1096
          %v1113 = vmul.f32 %v985, %v1097
          %v1114 = vmul.f32 %v986, %v1098
          %1115 = vst.msk [vmem:[%s338] sm:$0xff] %vm624, %v1099
          %1116 = vst.msk [vmem:[%s338 + $0x8] sm:$0xff] %vm624, %v1100
          %1117 = vst.msk [vmem:[%s338 + $0x10] sm:$0xff] %vm624, %v1101
          %1118 = vst.msk [vmem:[%s338 + $0x18] sm:$0xff] %vm624, %v1102
          %1119 = vst.msk [vmem:[%s338 + $0x20] sm:$0xff] %vm624, %v1103
          %1120 = vst.msk [vmem:[%s338 + $0x28] sm:$0xff] %vm624, %v1104
          %1121 = vst.msk [vmem:[%s338 + $0x30] sm:$0xff] %vm624, %v1105
          %1122 = vst.msk [vmem:[%s338 + $0x38] sm:$0xff] %vm624, %v1106
          %1123 = vst.msk [vmem:[%s338 + $0x40] sm:$0xff] %vm624, %v1107
          %1124 = vst.msk [vmem:[%s338 + $0x48] sm:$0xff] %vm624, %v1108
          %1125 = vst.msk [vmem:[%s338 + $0x50] sm:$0xff] %vm624, %v1109
          %1126 = vst.msk [vmem:[%s338 + $0x58] sm:$0xff] %vm624, %v1110
          %1127 = vst.msk [vmem:[%s338 + $0x60] sm:$0xff] %vm624, %v1111
          %1128 = vst.msk [vmem:[%s338 + $0x68] sm:$0xff] %vm624, %v1112
          %1129 = vst.msk [vmem:[%s338 + $0x70] sm:$0xff] %vm624, %v1113
          %1130 = vst.msk [vmem:[%s338 + $0x78] sm:$0xff] %vm624, %v1114
        $region85: #{graph_node_update_pallas.1} parent=72 // pred_fallthru
          _
        %s1131 = smul.u32 16, %s19
        %p1132 = scmp.lt.s32.totalorder %s1131, 31
        %s1133 = scalar_select %p1132, %s1131, 31
        %s1134 = smul.addr %s1133, 8
        %s1135 = scalar_lea.vmem %s4, %s1134
        // Predicated region
        $region86: #{graph_node_update_pallas.1} parent=72 // pred_check
          %p1136 = pneg %p141
        $region87: #{graph_node_update_pallas.1} parent=72 // pred_check_branch
          %1138 = sbr.rel (%p1136) target = $region89
        $region88: #{graph_node_update_pallas.1} parent=72 // pred_region
          %s1139 = smul.u32 16, %s19
        $region89: #{graph_node_update_pallas.1} parent=72 // pred_fallthru
          _
      $region73: #{graph_node_update_pallas.1} parent=5 // pred_fallthru
        _
      %p1140 = scmp.le.s32.totalorder 2, %s10
      // Predicated region
      $region90: #{graph_node_update_pallas.1} parent=5 // pred_check
        %p1141 = pneg %p1140
      $region91: #{graph_node_update_pallas.1} parent=5 // pred_check_branch
        %1143 = sbr.rel (%p1141) target = $region93
      $region92: #{graph_node_update_pallas.1} parent=5 // pred_region
        %s1144 = ssub.s32 %s10, 2
        // Predicated region
        $region94: #{graph_node_update_pallas.1} parent=92 // pred_check
          %p1145 = pneg %p147
        $region95: #{graph_node_update_pallas.1} parent=92 // pred_check_branch
          %1147 = sbr.rel (%p1145) target = $region97
        $region96: #{graph_node_update_pallas.1} parent=92 // pred_region
          %s1148 = smul.u32 16, %s21
          %p1149 = scmp.lt.s32.totalorder %s1148, 31
          %s1150 = scalar_select %p1149, %s1148, 31
          %s1151 = smul.addr %s1150, 8
          %s1152 = scalar_lea.vmem %s4, %s1151
        $region97: #{graph_node_update_pallas.1} parent=92 // pred_fallthru
          _
      $region93: #{graph_node_update_pallas.1} parent=5 // pred_fallthru
        _
    $region6: #{graph_node_update_pallas.1} parent=1 // loop_footer
      %s14 = sadd.s32 1, %s10
    $region7: #{graph_node_update_pallas.1} parent=1 // loop_footer_branch
      %9 = sbr.rel target = $region3
    $region8: #{graph_node_update_pallas.1} parent=1 // loop_exit
      _

</llo_original>
